<compile_context>
chip_gen: v7x
topology: tpu7x:2x2x1
jax: 0.10.0
libtpu: 0.0.40
codegen_flags: <defaults>
</compile_context>

<pallas_src>
from functools import partial

import jax
import jax.numpy as jnp
from jax import lax
from jax.experimental import pallas as pl
from jax.experimental.pallas import tpu as pltpu

LN_EPS = 1e-5  # PyTorch nn.LayerNorm default


def _decoder_embeddings_kernel(ids_ref, pos_ref,                 # scalar prefetch (SMEM)
                               word_ref, posemb_ref,             # VMEM-resident tables
                               gamma_ref, beta_ref,              # (1, H)
                               *rest, use_type, tile_rows):
    """One grid step = `tile_rows` flattened (batch*seq) token rows."""
    if use_type:
        tids_ref, type_ref, out_ref = rest
    else:
        (out_ref,) = rest

    base = pl.program_id(0) * tile_rows

    # 1) Row gather from the VMEM-resident word / position tables.
    #    Each iteration: two SMEM scalar reads + two dynamic-slice vector
    #    loads + one vector store into the output block (already in VMEM).
    def gather_row(r, carry):
        wid = ids_ref[base + r]
        pid = pos_ref[base + r]
        row = (word_ref[pl.ds(wid, 1), :].astype(jnp.float32)
               + posemb_ref[pl.ds(pid, 1), :].astype(jnp.float32))
        out_ref[pl.ds(r, 1), :] = row
        return carry

    lax.fori_loop(0, tile_rows, gather_row, 0, unroll=8)

    x = out_ref[...]                                              # (TILE, H) f32

    # 2) Type embedding (T == 3): VPU blend against the tiny resident table.
    if use_type:
        tids = tids_ref[...]                                      # (TILE, 1) int32
        t0 = type_ref[0:1, :].astype(jnp.float32)                 # (1, H)
        t1 = type_ref[1:2, :].astype(jnp.float32)
        t2 = type_ref[2:3, :].astype(jnp.float32)
        m1 = (tids >= 1).astype(jnp.float32)                      # (TILE, 1)
        m2 = (tids >= 2).astype(jnp.float32)
        x = x + t0 + m1 * (t1 - t0) + m2 * (t2 - t1)

    # 3) Fused one-pass LayerNorm (biased variance, like PyTorch).
    h = x.shape[-1]
    s1 = jnp.sum(x, axis=-1, keepdims=True)
    s2 = jnp.sum(x * x, axis=-1, keepdims=True)
    mean = s1 * (1.0 / h)
    var = jnp.maximum(s2 * (1.0 / h) - mean * mean, 0.0)
    inv = lax.rsqrt(var + LN_EPS)
    y = (x - mean) * inv * gamma_ref[...] + beta_ref[...]

    # 4) Dropout: identity in eval mode.
    out_ref[...] = y.astype(out_ref.dtype)


def decoder_embeddings(input_ids, word_tab, pos_tab, type_tab, gamma, beta,
                       position_ids=None, type_ids=None,
                       confidence_enabled=True, tile_rows=256):
    """Pallas implementation of DecoderEmbeddings.forward (eval mode).

    Returns float32 [batch, seq, hidden]."""
    B, S = input_ids.shape
    V, H = word_tab.shape
    P = pos_tab.shape[0]
    N = B * S

    # Tile size: as large as requested (cap 512), multiple of 8 sublanes, but
    # keep >= 2 grid steps when there is enough work so ("parallel",) can
    # shard across both TensorCores on v7x.
    TILE = (max(8, min(int(tile_rows), 512)) // 8) * 8
    if N > 8:
        half = -(-((N + 1) // 2) // 8) * 8
        TILE = min(TILE, half)
    n_pad = -(-N // TILE) * TILE
    pad = n_pad - N

    ids_flat = input_ids.astype(jnp.int32).reshape(N)
    if position_ids is None:
        position_ids = jnp.broadcast_to(
            jnp.arange(S, dtype=jnp.int32)[None, :], (B, S))
    pos_flat = position_ids.astype(jnp.int32).reshape(N)
    if pad:
        zpad = jnp.zeros((pad,), jnp.int32)
        ids_flat = jnp.concatenate([ids_flat, zpad])
        pos_flat = jnp.concatenate([pos_flat, zpad])

    # Static branch: skip the type path entirely at trace time when disabled.
    use_type = bool(confidence_enabled) and (type_ids is not None) and (
        type_tab is not None)

    gamma2d = gamma.reshape(1, H).astype(jnp.float32)
    beta2d = beta.reshape(1, H).astype(jnp.float32)

    # VMEM-resident tables: full-array blocks, same block index every step.
    in_specs = [
        pl.BlockSpec((V, H), lambda i, *_: (0, 0)),   # word table
        pl.BlockSpec((P, H), lambda i, *_: (0, 0)),   # position table
        pl.BlockSpec((1, H), lambda i, *_: (0, 0)),   # gamma
        pl.BlockSpec((1, H), lambda i, *_: (0, 0)),   # beta
    ]
    call_args = [ids_flat, pos_flat, word_tab, pos_tab, gamma2d, beta2d]

    type_bytes = 0
    if use_type:
        tids2d = type_ids.astype(jnp.int32).reshape(N, 1)
        if pad:
            tids2d = jnp.concatenate([tids2d, jnp.zeros((pad, 1), jnp.int32)])
        T = type_tab.shape[0]
        type_pad = type_tab if T >= 8 else jnp.concatenate(
            [type_tab, jnp.zeros((8 - T, H), type_tab.dtype)], axis=0)
        in_specs += [
            pl.BlockSpec((TILE, 1), lambda i, *_: (i, 0)),          # type ids
            pl.BlockSpec((type_pad.shape[0], H), lambda i, *_: (0, 0)),
        ]
        call_args += [tids2d, type_pad]
        type_bytes = int(type_pad.size) * type_pad.dtype.itemsize

    # VMEM budget: resident tables (x2 for pipeline buffers) + double-buffered
    # output / tids blocks + headroom.  Clamp at 48 MiB so it also fits v7x.
    table_bytes = (int(word_tab.size) * word_tab.dtype.itemsize
                   + int(pos_tab.size) * pos_tab.dtype.itemsize + type_bytes)
    pipe_bytes = 2 * (TILE * H * 4 + (TILE * 4 if use_type else 0))
    vmem_limit = int(min(max(2 * table_bytes + pipe_bytes + (4 << 20),
                             16 << 20), 48 << 20))

    kernel = partial(_decoder_embeddings_kernel,
                     use_type=use_type, tile_rows=TILE)

    out_flat = pl.pallas_call(
        kernel,
        out_shape=jax.ShapeDtypeStruct((n_pad, H), jnp.float32),
        grid_spec=pltpu.PrefetchScalarGridSpec(
            num_scalar_prefetch=2,
            grid=(n_pad // TILE,),
            in_specs=in_specs,
            out_specs=pl.BlockSpec((TILE, H), lambda i, *_: (i, 0)),
        ),
        compiler_params=pltpu.CompilerParams(
            dimension_semantics=("parallel",),
            vmem_limit_bytes=vmem_limit),
    )(*call_args)

    return out_flat[:N].reshape(B, S, H)


def _reference(input_ids, word_tab, pos_tab, type_tab, gamma, beta,
               type_ids=None):
    B, S = input_ids.shape
    pos_ids = jnp.broadcast_to(jnp.arange(S)[None, :], (B, S))
    x = word_tab[input_ids] + pos_tab[pos_ids]
    if type_ids is not None:
        x = x + type_tab[type_ids]
    mean = x.mean(-1, keepdims=True)
    var = ((x - mean) ** 2).mean(-1, keepdims=True)
    return (x - mean) / jnp.sqrt(var + LN_EPS) * gamma + beta


if __name__ == "__main__":
    # Small, module-consistent shapes (H = 128 keeps the output lane-dense).
    batch, seq_len, hidden_dim = 2, 8, 128
    vocab_size, max_position_embeddings = 16, 8

    key = jax.random.PRNGKey(0)
    k_word, k_pos, k_type, k_g, k_b, k_ids, k_tids = jax.random.split(key, 7)

    word_tab = jax.random.normal(k_word, (vocab_size, hidden_dim), jnp.float32)
    pos_tab = jax.random.normal(k_pos, (max_position_embeddings, hidden_dim),
                                jnp.float32)
    type_tab = jax.random.normal(k_type, (3, hidden_dim), jnp.float32)
    gamma = 1.0 + 0.1 * jax.random.normal(k_g, (hidden_dim,), jnp.float32)
    beta = 0.1 * jax.random.normal(k_b, (hidden_dim,), jnp.float32)

    input_ids = jax.random.randint(k_ids, (batch, seq_len), 0, vocab_size,
                                   dtype=jnp.int32)
    type_ids = jax.random.randint(k_tids, (batch, seq_len), 0, 3,
                                  dtype=jnp.int32)

    # With confidence / type embeddings enabled.
    out = decoder_embeddings(input_ids, word_tab, pos_tab, type_tab,
                             gamma, beta, position_ids=None,
                             type_ids=type_ids, confidence_enabled=True)
    out = jax.block_until_ready(out)
    ref = _reference(input_ids, word_tab, pos_tab, type_tab, gamma, beta,
                     type_ids=type_ids)
    assert out.shape == (batch, seq_len, hidden_dim)
    assert jnp.allclose(out, ref, atol=1e-4, rtol=1e-4)

    # With confidence disabled (type path skipped at trace time).
    out2 = decoder_embeddings(input_ids, word_tab, pos_tab, type_tab,
                              gamma, beta, position_ids=None,
                              type_ids=type_ids, confidence_enabled=False)
    out2 = jax.block_until_ready(out2)
    ref2 = _reference(input_ids, word_tab, pos_tab, type_tab, gamma, beta,
                      type_ids=None)
    assert jnp.allclose(out2, ref2, atol=1e-4, rtol=1e-4)

    print("KERNEL_OK")
</pallas_src>

<mosaic_0001>
module attributes {stable_mosaic.version = 11 : i64} {
  func.func @_decoder_embeddings_kernel(%arg0: i32, %arg1: memref<16xi32, #tpu.memory_space<smem>>, %arg2: memref<16xi32, #tpu.memory_space<smem>>, %arg3: memref<16x128xf32, #tpu.memory_space<vmem>>, %arg4: memref<8x128xf32, #tpu.memory_space<vmem>>, %arg5: memref<1x128xf32, #tpu.memory_space<vmem>>, %arg6: memref<1x128xf32, #tpu.memory_space<vmem>>, %arg7: memref<8x1xi32, #tpu.memory_space<vmem>>, %arg8: memref<8x128xf32, #tpu.memory_space<vmem>>, %arg9: memref<8x128xf32, #tpu.memory_space<vmem>>) attributes {dimension_semantics = [#tpu.dimension_semantics<parallel>], iteration_bounds = array<i64: 2>, scalar_prefetch = 2 : i64, scratch_operands = 0 : i64, tpu.core_type = #tpu.core_type<tc>, window_params = [{pipeline_mode = #tpu.pipeline_mode<synchronous>, transform_indices = @transform_0, window_bounds = array<i64: 16, 128>}, {pipeline_mode = #tpu.pipeline_mode<synchronous>, transform_indices = @transform_1, window_bounds = array<i64: 8, 128>}, {pipeline_mode = #tpu.pipeline_mode<synchronous>, transform_indices = @transform_2, window_bounds = array<i64: 1, 128>}, {pipeline_mode = #tpu.pipeline_mode<synchronous>, transform_indices = @transform_3, window_bounds = array<i64: 1, 128>}, {transform_indices = @transform_4, window_bounds = array<i64: 8, 1>}, {pipeline_mode = #tpu.pipeline_mode<synchronous>, transform_indices = @transform_5, window_bounds = array<i64: 8, 128>}, {transform_indices = @transform_6, window_bounds = array<i64: 8, 128>}]} {
    %c8_i32 = arith.constant 8 : i32
    %0 = arith.muli %arg0, %c8_i32 : i32
    %c0_i32 = arith.constant 0 : i32
    %1 = arith.addi %0, %c0_i32 : i32
    %2 = arith.index_cast %1 : i32 to index
    %3 = memref.load %arg1[%2] : memref<16xi32, #tpu.memory_space<smem>>
    %4 = arith.addi %0, %c0_i32 : i32
    %5 = arith.index_cast %4 : i32 to index
    %6 = memref.load %arg2[%5] : memref<16xi32, #tpu.memory_space<smem>>
    %7 = arith.index_cast %3 : i32 to index
    %c0 = arith.constant 0 : index
    %8 = vector.load %arg3[%7, %c0] : memref<16x128xf32, #tpu.memory_space<vmem>>, vector<1x128xf32>
    %9 = arith.index_cast %6 : i32 to index
    %c0_0 = arith.constant 0 : index
    %10 = vector.load %arg4[%9, %c0_0] : memref<8x128xf32, #tpu.memory_space<vmem>>, vector<1x128xf32>
    %11 = arith.addf %8, %10 : vector<1x128xf32>
    %12 = arith.index_cast %c0_i32 : i32 to index
    %c0_1 = arith.constant 0 : index
    %13 = vector.load %arg9[%12, %c0_1] : memref<8x128xf32, #tpu.memory_space<vmem>>, vector<1x128xf32>
    tpu.vector_store %arg9[%12, %c0_1], %11 {strides = array<i32>} : memref<8x128xf32, #tpu.memory_space<vmem>>, vector<1x128xf32>,
    %c1_i32 = arith.constant 1 : i32
    %14 = arith.addi %0, %c1_i32 : i32
    %15 = arith.index_cast %14 : i32 to index
    %16 = memref.load %arg1[%15] : memref<16xi32, #tpu.memory_space<smem>>
    %17 = arith.addi %0, %c1_i32 : i32
    %18 = arith.index_cast %17 : i32 to index
    %19 = memref.load %arg2[%18] : memref<16xi32, #tpu.memory_space<smem>>
    %20 = arith.index_cast %16 : i32 to index
    %c0_2 = arith.constant 0 : index
    %21 = vector.load %arg3[%20, %c0_2] : memref<16x128xf32, #tpu.memory_space<vmem>>, vector<1x128xf32>
    %22 = arith.index_cast %19 : i32 to index
    %c0_3 = arith.constant 0 : index
    %23 = vector.load %arg4[%22, %c0_3] : memref<8x128xf32, #tpu.memory_space<vmem>>, vector<1x128xf32>
    %24 = arith.addf %21, %23 : vector<1x128xf32>
    %25 = arith.index_cast %c1_i32 : i32 to index
    %c0_4 = arith.constant 0 : index
    %26 = vector.load %arg9[%25, %c0_4] : memref<8x128xf32, #tpu.memory_space<vmem>>, vector<1x128xf32>
    tpu.vector_store %arg9[%25, %c0_4], %24 {strides = array<i32>} : memref<8x128xf32, #tpu.memory_space<vmem>>, vector<1x128xf32>,
    %c2_i32 = arith.constant 2 : i32
    %27 = arith.addi %0, %c2_i32 : i32
    %28 = arith.index_cast %27 : i32 to index
    %29 = memref.load %arg1[%28] : memref<16xi32, #tpu.memory_space<smem>>
    %30 = arith.addi %0, %c2_i32 : i32
    %31 = arith.index_cast %30 : i32 to index
    %32 = memref.load %arg2[%31] : memref<16xi32, #tpu.memory_space<smem>>
    %33 = arith.index_cast %29 : i32 to index
    %c0_5 = arith.constant 0 : index
    %34 = vector.load %arg3[%33, %c0_5] : memref<16x128xf32, #tpu.memory_space<vmem>>, vector<1x128xf32>
    %35 = arith.index_cast %32 : i32 to index
    %c0_6 = arith.constant 0 : index
    %36 = vector.load %arg4[%35, %c0_6] : memref<8x128xf32, #tpu.memory_space<vmem>>, vector<1x128xf32>
    %37 = arith.addf %34, %36 : vector<1x128xf32>
    %38 = arith.index_cast %c2_i32 : i32 to index
    %c0_7 = arith.constant 0 : index
    %39 = vector.load %arg9[%38, %c0_7] : memref<8x128xf32, #tpu.memory_space<vmem>>, vector<1x128xf32>
    tpu.vector_store %arg9[%38, %c0_7], %37 {strides = array<i32>} : memref<8x128xf32, #tpu.memory_space<vmem>>, vector<1x128xf32>,
    %c3_i32 = arith.constant 3 : i32
    %40 = arith.addi %0, %c3_i32 : i32
    %41 = arith.index_cast %40 : i32 to index
    %42 = memref.load %arg1[%41] : memref<16xi32, #tpu.memory_space<smem>>
    %43 = arith.addi %0, %c3_i32 : i32
    %44 = arith.index_cast %43 : i32 to index
    %45 = memref.load %arg2[%44] : memref<16xi32, #tpu.memory_space<smem>>
    %46 = arith.index_cast %42 : i32 to index
    %c0_8 = arith.constant 0 : index
    %47 = vector.load %arg3[%46, %c0_8] : memref<16x128xf32, #tpu.memory_space<vmem>>, vector<1x128xf32>
    %48 = arith.index_cast %45 : i32 to index
    %c0_9 = arith.constant 0 : index
    %49 = vector.load %arg4[%48, %c0_9] : memref<8x128xf32, #tpu.memory_space<vmem>>, vector<1x128xf32>
    %50 = arith.addf %47, %49 : vector<1x128xf32>
    %51 = arith.index_cast %c3_i32 : i32 to index
    %c0_10 = arith.constant 0 : index
    %52 = vector.load %arg9[%51, %c0_10] : memref<8x128xf32, #tpu.memory_space<vmem>>, vector<1x128xf32>
    tpu.vector_store %arg9[%51, %c0_10], %50 {strides = array<i32>} : memref<8x128xf32, #tpu.memory_space<vmem>>, vector<1x128xf32>,
    %c4_i32 = arith.constant 4 : i32
    %53 = arith.addi %0, %c4_i32 : i32
    %54 = arith.index_cast %53 : i32 to index
    %55 = memref.load %arg1[%54] : memref<16xi32, #tpu.memory_space<smem>>
    %56 = arith.addi %0, %c4_i32 : i32
    %57 = arith.index_cast %56 : i32 to index
    %58 = memref.load %arg2[%57] : memref<16xi32, #tpu.memory_space<smem>>
    %59 = arith.index_cast %55 : i32 to index
    %c0_11 = arith.constant 0 : index
    %60 = vector.load %arg3[%59, %c0_11] : memref<16x128xf32, #tpu.memory_space<vmem>>, vector<1x128xf32>
    %61 = arith.index_cast %58 : i32 to index
    %c0_12 = arith.constant 0 : index
    %62 = vector.load %arg4[%61, %c0_12] : memref<8x128xf32, #tpu.memory_space<vmem>>, vector<1x128xf32>
    %63 = arith.addf %60, %62 : vector<1x128xf32>
    %64 = arith.index_cast %c4_i32 : i32 to index
    %c0_13 = arith.constant 0 : index
    %65 = vector.load %arg9[%64, %c0_13] : memref<8x128xf32, #tpu.memory_space<vmem>>, vector<1x128xf32>
    tpu.vector_store %arg9[%64, %c0_13], %63 {strides = array<i32>} : memref<8x128xf32, #tpu.memory_space<vmem>>, vector<1x128xf32>,
    %c5_i32 = arith.constant 5 : i32
    %66 = arith.addi %0, %c5_i32 : i32
    %67 = arith.index_cast %66 : i32 to index
    %68 = memref.load %arg1[%67] : memref<16xi32, #tpu.memory_space<smem>>
    %69 = arith.addi %0, %c5_i32 : i32
    %70 = arith.index_cast %69 : i32 to index
    %71 = memref.load %arg2[%70] : memref<16xi32, #tpu.memory_space<smem>>
    %72 = arith.index_cast %68 : i32 to index
    %c0_14 = arith.constant 0 : index
    %73 = vector.load %arg3[%72, %c0_14] : memref<16x128xf32, #tpu.memory_space<vmem>>, vector<1x128xf32>
    %74 = arith.index_cast %71 : i32 to index
    %c0_15 = arith.constant 0 : index
    %75 = vector.load %arg4[%74, %c0_15] : memref<8x128xf32, #tpu.memory_space<vmem>>, vector<1x128xf32>
    %76 = arith.addf %73, %75 : vector<1x128xf32>
    %77 = arith.index_cast %c5_i32 : i32 to index
    %c0_16 = arith.constant 0 : index
    %78 = vector.load %arg9[%77, %c0_16] : memref<8x128xf32, #tpu.memory_space<vmem>>, vector<1x128xf32>
    tpu.vector_store %arg9[%77, %c0_16], %76 {strides = array<i32>} : memref<8x128xf32, #tpu.memory_space<vmem>>, vector<1x128xf32>,
    %c6_i32 = arith.constant 6 : i32
    %79 = arith.addi %0, %c6_i32 : i32
    %80 = arith.index_cast %79 : i32 to index
    %81 = memref.load %arg1[%80] : memref<16xi32, #tpu.memory_space<smem>>
    %82 = arith.addi %0, %c6_i32 : i32
    %83 = arith.index_cast %82 : i32 to index
    %84 = memref.load %arg2[%83] : memref<16xi32, #tpu.memory_space<smem>>
    %85 = arith.index_cast %81 : i32 to index
    %c0_17 = arith.constant 0 : index
    %86 = vector.load %arg3[%85, %c0_17] : memref<16x128xf32, #tpu.memory_space<vmem>>, vector<1x128xf32>
    %87 = arith.index_cast %84 : i32 to index
    %c0_18 = arith.constant 0 : index
    %88 = vector.load %arg4[%87, %c0_18] : memref<8x128xf32, #tpu.memory_space<vmem>>, vector<1x128xf32>
    %89 = arith.addf %86, %88 : vector<1x128xf32>
    %90 = arith.index_cast %c6_i32 : i32 to index
    %c0_19 = arith.constant 0 : index
    %91 = vector.load %arg9[%90, %c0_19] : memref<8x128xf32, #tpu.memory_space<vmem>>, vector<1x128xf32>
    tpu.vector_store %arg9[%90, %c0_19], %89 {strides = array<i32>} : memref<8x128xf32, #tpu.memory_space<vmem>>, vector<1x128xf32>,
    %c7_i32 = arith.constant 7 : i32
    %92 = arith.addi %0, %c7_i32 : i32
    %93 = arith.index_cast %92 : i32 to index
    %94 = memref.load %arg1[%93] : memref<16xi32, #tpu.memory_space<smem>>
    %95 = arith.addi %0, %c7_i32 : i32
    %96 = arith.index_cast %95 : i32 to index
    %97 = memref.load %arg2[%96] : memref<16xi32, #tpu.memory_space<smem>>
    %98 = arith.index_cast %94 : i32 to index
    %c0_20 = arith.constant 0 : index
    %99 = vector.load %arg3[%98, %c0_20] : memref<16x128xf32, #tpu.memory_space<vmem>>, vector<1x128xf32>
    %100 = arith.index_cast %97 : i32 to index
    %c0_21 = arith.constant 0 : index
    %101 = vector.load %arg4[%100, %c0_21] : memref<8x128xf32, #tpu.memory_space<vmem>>, vector<1x128xf32>
    %102 = arith.addf %99, %101 : vector<1x128xf32>
    %103 = arith.index_cast %c7_i32 : i32 to index
    %c0_22 = arith.constant 0 : index
    %104 = vector.load %arg9[%103, %c0_22] : memref<8x128xf32, #tpu.memory_space<vmem>>, vector<1x128xf32>
    tpu.vector_store %arg9[%103, %c0_22], %102 {strides = array<i32>} : memref<8x128xf32, #tpu.memory_space<vmem>>, vector<1x128xf32>,
    %c8_i32_23 = arith.constant 8 : i32
    %c0_24 = arith.constant 0 : index
    %c0_25 = arith.constant 0 : index
    %105 = vector.load %arg9[%c0_24, %c0_25] : memref<8x128xf32, #tpu.memory_space<vmem>>, vector<8x128xf32>
    %c0_26 = arith.constant 0 : index
    %c0_27 = arith.constant 0 : index
    %106 = vector.load %arg7[%c0_26, %c0_27] : memref<8x1xi32, #tpu.memory_space<vmem>>, vector<8x1xi32>
    %c0_28 = arith.constant 0 : index
    %c0_29 = arith.constant 0 : index
    %107 = vector.load %arg8[%c0_28, %c0_29] : memref<8x128xf32, #tpu.memory_space<vmem>>, vector<1x128xf32>
    %c1 = arith.constant 1 : index
    %c0_30 = arith.constant 0 : index
    %108 = vector.load %arg8[%c1, %c0_30] : memref<8x128xf32, #tpu.memory_space<vmem>>, vector<1x128xf32>
    %c2 = arith.constant 2 : index
    %c0_31 = arith.constant 0 : index
    %109 = vector.load %arg8[%c2, %c0_31] : memref<8x128xf32, #tpu.memory_space<vmem>>, vector<1x128xf32>
    %c1_i32_32 = arith.constant 1 : i32
    %110 = vector.broadcast %c1_i32_32 : i32 to vector<8x1xi32>
    %111 = arith.cmpi sge, %106, %110 : vector<8x1xi32>
    %112 = arith.extui %111 : vector<8x1xi1> to vector<8x1xi32>
    %113 = arith.sitofp %112 : vector<8x1xi32> to vector<8x1xf32>
    %c2_i32_33 = arith.constant 2 : i32
    %114 = vector.broadcast %c2_i32_33 : i32 to vector<8x1xi32>
    %115 = arith.cmpi sge, %106, %114 : vector<8x1xi32>
    %116 = arith.extui %115 : vector<8x1xi1> to vector<8x1xi32>
    %117 = arith.sitofp %116 : vector<8x1xi32> to vector<8x1xf32>
    %118 = vector.broadcast %107 : vector<1x128xf32> to vector<8x128xf32>
    %119 = arith.addf %105, %118 : vector<8x128xf32>
    %120 = arith.subf %108, %107 : vector<1x128xf32>
    %121 = vector.broadcast %113 : vector<8x1xf32> to vector<8x128xf32>
    %122 = vector.broadcast %120 : vector<1x128xf32> to vector<8x128xf32>
    %123 = arith.mulf %121, %122 : vector<8x128xf32>
    %124 = arith.addf %119, %123 : vector<8x128xf32>
    %125 = arith.subf %109, %108 : vector<1x128xf32>
    %126 = vector.broadcast %117 : vector<8x1xf32> to vector<8x128xf32>
    %127 = vector.broadcast %125 : vector<1x128xf32> to vector<8x128xf32>
    %128 = arith.mulf %126, %127 : vector<8x128xf32>
    %129 = arith.addf %124, %128 : vector<8x128xf32>
    %cst = arith.constant dense<0.000000e+00> : vector<8xf32>
    %130 = vector.multi_reduction <add>, %129, %cst [1] : vector<8x128xf32> to vector<8xf32>
    %131 = vector.shape_cast %130 : vector<8xf32> to vector<8x1xf32>
    %132 = arith.mulf %129, %129 : vector<8x128xf32>
    %cst_34 = arith.constant dense<0.000000e+00> : vector<8xf32>
    %133 = vector.multi_reduction <add>, %132, %cst_34 [1] : vector<8x128xf32> to vector<8xf32>
    %134 = vector.shape_cast %133 : vector<8xf32> to vector<8x1xf32>
    %cst_35 = arith.constant 7.812500e-03 : f32
    %135 = vector.broadcast %cst_35 : f32 to vector<8x1xf32>
    %136 = arith.mulf %131, %135 : vector<8x1xf32>
    %cst_36 = arith.constant 7.812500e-03 : f32
    %137 = vector.broadcast %cst_36 : f32 to vector<8x1xf32>
    %138 = arith.mulf %134, %137 : vector<8x1xf32>
    %139 = arith.mulf %136, %136 : vector<8x1xf32>
    %140 = arith.subf %138, %139 : vector<8x1xf32>
    %cst_37 = arith.constant 0.000000e+00 : f32
    %141 = vector.broadcast %cst_37 : f32 to vector<8x1xf32>
    %142 = arith.maximumf %140, %141 : vector<8x1xf32>
    %cst_38 = arith.constant 9.99999974E-6 : f32
    %143 = vector.broadcast %cst_38 : f32 to vector<8x1xf32>
    %144 = arith.addf %142, %143 : vector<8x1xf32>
    %145 = math.rsqrt %144 : vector<8x1xf32>
    %146 = vector.broadcast %136 : vector<8x1xf32> to vector<8x128xf32>
    %147 = arith.subf %129, %146 : vector<8x128xf32>
    %148 = vector.broadcast %145 : vector<8x1xf32> to vector<8x128xf32>
    %149 = arith.mulf %147, %148 : vector<8x128xf32>
    %c0_39 = arith.constant 0 : index
    %c0_40 = arith.constant 0 : index
    %150 = vector.load %arg5[%c0_39, %c0_40] : memref<1x128xf32, #tpu.memory_space<vmem>>, vector<1x128xf32>
    %151 = vector.broadcast %150 : vector<1x128xf32> to vector<8x128xf32>
    %152 = arith.mulf %149, %151 : vector<8x128xf32>
    %c0_41 = arith.constant 0 : index
    %c0_42 = arith.constant 0 : index
    %153 = vector.load %arg6[%c0_41, %c0_42] : memref<1x128xf32, #tpu.memory_space<vmem>>, vector<1x128xf32>
    %154 = vector.broadcast %153 : vector<1x128xf32> to vector<8x128xf32>
    %155 = arith.addf %152, %154 : vector<8x128xf32>
    %c0_43 = arith.constant 0 : index
    %c0_44 = arith.constant 0 : index
    %156 = vector.load %arg9[%c0_43, %c0_44] : memref<8x128xf32, #tpu.memory_space<vmem>>, vector<8x128xf32>
    tpu.vector_store %arg9[%c0_43, %c0_44], %155 {strides = array<i32>} : memref<8x128xf32, #tpu.memory_space<vmem>>, vector<8x128xf32>,
    return
  }
  func.func @transform_0(%arg0: i32, %arg1: memref<16xi32, #tpu.memory_space<smem>>, %arg2: memref<16xi32, #tpu.memory_space<smem>>) -> (i32, i32) {
    %c0_i32 = arith.constant 0 : i32
    %c0_i32_0 = arith.constant 0 : i32
    %c0_i32_1 = arith.constant 0 : i32
    return %c0_i32, %c0_i32_0 : i32, i32
  }
  func.func @transform_1(%arg0: i32, %arg1: memref<16xi32, #tpu.memory_space<smem>>, %arg2: memref<16xi32, #tpu.memory_space<smem>>) -> (i32, i32) {
    %c0_i32 = arith.constant 0 : i32
    %c0_i32_0 = arith.constant 0 : i32
    %c0_i32_1 = arith.constant 0 : i32
    return %c0_i32, %c0_i32_0 : i32, i32
  }
  func.func @transform_2(%arg0: i32, %arg1: memref<16xi32, #tpu.memory_space<smem>>, %arg2: memref<16xi32, #tpu.memory_space<smem>>) -> (i32, i32) {
    %c0_i32 = arith.constant 0 : i32
    %c0_i32_0 = arith.constant 0 : i32
    %c0_i32_1 = arith.constant 0 : i32
    return %c0_i32, %c0_i32_0 : i32, i32
  }
  func.func @transform_3(%arg0: i32, %arg1: memref<16xi32, #tpu.memory_space<smem>>, %arg2: memref<16xi32, #tpu.memory_space<smem>>) -> (i32, i32) {
    %c0_i32 = arith.constant 0 : i32
    %c0_i32_0 = arith.constant 0 : i32
    %c0_i32_1 = arith.constant 0 : i32
    return %c0_i32, %c0_i32_0 : i32, i32
  }
  func.func @transform_4(%arg0: i32, %arg1: memref<16xi32, #tpu.memory_space<smem>>, %arg2: memref<16xi32, #tpu.memory_space<smem>>) -> (i32, i32) {
    %c0_i32 = arith.constant 0 : i32
    %c0_i32_0 = arith.constant 0 : i32
    return %arg0, %c0_i32 : i32, i32
  }
  func.func @transform_5(%arg0: i32, %arg1: memref<16xi32, #tpu.memory_space<smem>>, %arg2: memref<16xi32, #tpu.memory_space<smem>>) -> (i32, i32) {
    %c0_i32 = arith.constant 0 : i32
    %c0_i32_0 = arith.constant 0 : i32
    %c0_i32_1 = arith.constant 0 : i32
    return %c0_i32, %c0_i32_0 : i32, i32
  }
  func.func @transform_6(%arg0: i32, %arg1: memref<16xi32, #tpu.memory_space<smem>>, %arg2: memref<16xi32, #tpu.memory_space<smem>>) -> (i32, i32) {
    %c0_i32 = arith.constant 0 : i32
    %c0_i32_0 = arith.constant 0 : i32
    return %arg0, %c0_i32 : i32, i32
  }
}

</mosaic_0001>

<llo_original>
// kernel: tpu_custom_call.1
$region0: #{tpu_custom_call.1}
  #allocation0 [shape = 'u32[]', space=smem, size = 0x4, offset = 0x4, fixed_abs, tag = 'smem constant byte address 0x4 - core index']
  #allocation1 [shape = 'u32[144,128]{1,0:T(1,128)}', space=vmem, size = 0x12000, scoped, tag = 'internal scratch']
  #allocation2 [shape = 's32[1]{0}', space=sflag, size = 0x4, scoped, tag = 'scoped memory for tpu_custom_call.1']
  #allocation3 [shape = 'u8[512]{0}', space=smem, size = 0x200, scoped, tag = 'prefetched SMEM operand 0']
  #allocation4 [shape = 'u8[512]{0}', space=smem, size = 0x200, scoped, tag = 'prefetched SMEM operand 1']
  %s0 = inlined_call_operand.hbm [shape: s32[16], index: 0, kind: input, shape index: {}]
  %s1 = inlined_call_operand.hbm [shape: s32[16], index: 1, kind: input, shape index: {}]
  %s2 = inlined_call_operand.vmem [shape: f32[16,128], index: 2, kind: input, shape index: {}]
  %s3 = inlined_call_operand.vmem [shape: f32[8,128], index: 3, kind: input, shape index: {}]
  %s4 = inlined_call_operand.hbm [shape: f32[1,128], index: 4, kind: input, shape index: {}]
  %s5 = inlined_call_operand.vmem [shape: f32[1,128], index: 5, kind: input, shape index: {}]
  %s6 = inlined_call_operand.vmem [shape: s32[16,1], index: 6, kind: input, shape index: {}]
  %s7 = inlined_call_operand.vmem [shape: f32[8,128], index: 7, kind: input, shape index: {}]
  %s8 = inlined_call_operand.hbm [shape: f32[16,128], index: 8, kind: output, shape index: {}]
  %s9 = sld [smem:[#allocation0]]
  $region61: #{tpu_custom_call.1} parent=0
    _
  %s11 = ssub.s32 1, %s9
  %s12 = scalar_select 0, %s11, %s9
  %14 = dma.hbm_to_smem %s0, 16, [#allocation3], [#allocation2]
  %16 = dma.hbm_to_smem %s1, 16, [#allocation4], [#allocation2]
  %17 = dma.done [#allocation2], 32
  %18 = sfence
  $region1: #{tpu_custom_call.1} parent=0
    #allocation5 [shape = 'u8[512]{0}', space=vmem, size = 0x400, scoped, tag = 'input window, operand 4, single buffered']
    #allocation6 [shape = 's32[2]{0}', space=sflag, size = 0x8, scoped, tag = 'scoped memory for tpu_custom_call.1']
    #allocation7 [shape = 's32[2]{0}', space=sflag, size = 0x8, scoped, tag = 'scoped memory for tpu_custom_call.1']
    #allocation8 [shape = 'u8[8192]{0}', space=vmem, size = 0x2000, scoped, tag = 'output window, operand 0']
    %19 = vsyncpa [#allocation6], 0
    %20 = vsyncpa [#allocation7], 0
    %s21 = scalar_lea.sflag [#allocation7], 1
    %22 = vsyncpa %s21, 0
    loop: start=0, step=1, limit=4
    $region2: #{tpu_custom_call.1} parent=1 // loop_pre_header
      _
    $region3: #{tpu_custom_call.1} parent=1 // loop_header
      %s24 = sphi 0, %s28
      %p25 = scmp.ge.s32.totalorder %s24, 4
      %s32 = sphi 0, %s32
      %s34 = sphi 0, %s32
      %s35 = sphi 0, %s34
      %s49 = sphi 0, %s35
      %s53 = sphi 0, %s53
      %s55 = sphi 0, %s53
      %s56 = sphi 0, %s55
      %s70 = sphi 0, %s56
      %s74 = sphi 0, %s74
      %s76 = sphi 0, %s74
      %s77 = sphi 0, %s76
      %s91 = sphi 0, %s77
      %s95 = sphi 0, %s95
      %s97 = sphi 0, %s95
      %s98 = sphi 0, %s97
      %s112 = sphi 0, %s98
      %s118 = sphi 0, %s120
      %s121 = sphi 0, %s118
      %s122 = sphi 0, %s121
      %s138 = sphi 0, %s122
      %s142 = sphi 0, %s142
      %s144 = sphi 0, %s142
      %s145 = sphi 0, %s144
      %s159 = sphi 0, %s145
      %s165 = sphi 0, %s167
      %s168 = sphi 0, %s165
      %s169 = sphi 0, %s168
      %s185 = sphi 0, %s169
    $region4: #{tpu_custom_call.1} parent=1 // loop_header_branch
      %27 = sbr.rel (%p25) target = $region8
    $region5: #{tpu_custom_call.1} parent=1 // loop_body
      %s29 = ssub.s32 %s24, 1
      %s30 = ssub.s32 %s24, 2
      %s31 = sadd.s32 %s24, 1
      %s33 = sadd.s32 %s32, 1
      %p36 = scmp.eq.s32.totalorder %s24, 1
      %p37 = scmp.ne.s32.totalorder %s32, %s34
      %p38 = scmp.eq.s32.totalorder %s24, 0
      %p39 = por %p37, %p38
      %p40 = scmp.ne.s32.totalorder %s32, %s34
      %p41 = scmp.eq.s32.totalorder %s29, 1
      %p42 = por %p40, %p41
      %p43 = scmp.ne.s32.totalorder %s34, %s35
      %p44 = scmp.eq.s32.totalorder %s29, 0
      %p45 = por %p43, %p44
      %p46 = scmp.ne.s32.totalorder %s34, %s35
      %p47 = scmp.eq.s32.totalorder %s30, 1
      %p48 = por %p46, %p47
      %p50 = scmp.ne.s32.totalorder %s35, %s49
      %p51 = scmp.eq.s32.totalorder %s30, 0
      %p52 = por %p50, %p51
      %s54 = sadd.s32 %s53, 1
      %p57 = scmp.eq.s32.totalorder %s24, 1
      %p58 = scmp.ne.s32.totalorder %s53, %s55
      %p59 = scmp.eq.s32.totalorder %s24, 0
      %p60 = por %p58, %p59
      %p61 = scmp.ne.s32.totalorder %s53, %s55
      %p62 = scmp.eq.s32.totalorder %s29, 1
      %p63 = por %p61, %p62
      %p64 = scmp.ne.s32.totalorder %s55, %s56
      %p65 = scmp.eq.s32.totalorder %s29, 0
      %p66 = por %p64, %p65
      %p67 = scmp.ne.s32.totalorder %s55, %s56
      %p68 = scmp.eq.s32.totalorder %s30, 1
      %p69 = por %p67, %p68
      %p71 = scmp.ne.s32.totalorder %s56, %s70
      %p72 = scmp.eq.s32.totalorder %s30, 0
      %p73 = por %p71, %p72
      %s75 = sadd.s32 %s74, 1
      %p78 = scmp.eq.s32.totalorder %s24, 1
      %p79 = scmp.ne.s32.totalorder %s74, %s76
      %p80 = scmp.eq.s32.totalorder %s24, 0
      %p81 = por %p79, %p80
      %p82 = scmp.ne.s32.totalorder %s74, %s76
      %p83 = scmp.eq.s32.totalorder %s29, 1
      %p84 = por %p82, %p83
      %p85 = scmp.ne.s32.totalorder %s76, %s77
      %p86 = scmp.eq.s32.totalorder %s29, 0
      %p87 = por %p85, %p86
      %p88 = scmp.ne.s32.totalorder %s76, %s77
      %p89 = scmp.eq.s32.totalorder %s30, 1
      %p90 = por %p88, %p89
      %p92 = scmp.ne.s32.totalorder %s77, %s91
      %p93 = scmp.eq.s32.totalorder %s30, 0
      %p94 = por %p92, %p93
      %s96 = sadd.s32 %s95, 1
      %p99 = scmp.eq.s32.totalorder %s24, 1
      %p100 = scmp.ne.s32.totalorder %s95, %s97
      %p101 = scmp.eq.s32.totalorder %s24, 0
      %p102 = por %p100, %p101
      %p103 = scmp.ne.s32.totalorder %s95, %s97
      %p104 = scmp.eq.s32.totalorder %s29, 1
      %p105 = por %p103, %p104
      %p106 = scmp.ne.s32.totalorder %s97, %s98
      %p107 = scmp.eq.s32.totalorder %s29, 0
      %p108 = por %p106, %p107
      %p109 = scmp.ne.s32.totalorder %s97, %s98
      %p110 = scmp.eq.s32.totalorder %s30, 1
      %p111 = por %p109, %p110
      %p113 = scmp.ne.s32.totalorder %s98, %s112
      %p114 = scmp.eq.s32.totalorder %s30, 0
      %p115 = por %p113, %p114
      %s116 = ssub.s32 %s24, %s31
      %p117 = scmp.eq.s32.totalorder %s116, 0
      %s119 = sadd.s32 %s118, 1
      %s120 = scalar_select %p117, %s118, %s119
      %p123 = pneg %p117
      %p124 = scmp.eq.s32.totalorder %s24, 1
      %p125 = por %p123, %p124
      %p126 = scmp.ne.s32.totalorder %s118, %s121
      %p127 = scmp.eq.s32.totalorder %s24, 0
      %p128 = por %p126, %p127
      %p129 = scmp.ne.s32.totalorder %s118, %s121
      %p130 = scmp.eq.s32.totalorder %s29, 1
      %p131 = por %p129, %p130
      %p132 = scmp.ne.s32.totalorder %s121, %s122
      %p133 = scmp.eq.s32.totalorder %s29, 0
      %p134 = por %p132, %p133
      %p135 = scmp.ne.s32.totalorder %s121, %s122
      %p136 = scmp.eq.s32.totalorder %s30, 1
      %p137 = por %p135, %p136
      %p139 = scmp.ne.s32.totalorder %s122, %s138
      %p140 = scmp.eq.s32.totalorder %s30, 0
      %p141 = por %p139, %p140
      %s143 = sadd.s32 %s142, 1
      %p146 = scmp.eq.s32.totalorder %s24, 1
      %p147 = scmp.ne.s32.totalorder %s142, %s144
      %p148 = scmp.eq.s32.totalorder %s24, 0
      %p149 = por %p147, %p148
      %p150 = scmp.ne.s32.totalorder %s142, %s144
      %p151 = scmp.eq.s32.totalorder %s29, 1
      %p152 = por %p150, %p151
      %p153 = scmp.ne.s32.totalorder %s144, %s145
      %p154 = scmp.eq.s32.totalorder %s29, 0
      %p155 = por %p153, %p154
      %p156 = scmp.ne.s32.totalorder %s144, %s145
      %p157 = scmp.eq.s32.totalorder %s30, 1
      %p158 = por %p156, %p157
      %p160 = scmp.ne.s32.totalorder %s145, %s159
      %p161 = scmp.eq.s32.totalorder %s30, 0
      %p162 = por %p160, %p161
      %s163 = ssub.s32 %s24, %s31
      %p164 = scmp.eq.s32.totalorder %s163, 0
      %s166 = sadd.s32 %s165, 1
      %s167 = scalar_select %p164, %s165, %s166
      %p170 = pneg %p164
      %p171 = scmp.eq.s32.totalorder %s24, 1
      %p172 = por %p170, %p171
      %p173 = scmp.ne.s32.totalorder %s165, %s168
      %p174 = scmp.eq.s32.totalorder %s24, 0
      %p175 = por %p173, %p174
      %p176 = scmp.ne.s32.totalorder %s165, %s168
      %p177 = scmp.eq.s32.totalorder %s29, 1
      %p178 = por %p176, %p177
      %p179 = scmp.ne.s32.totalorder %s168, %s169
      %p180 = scmp.eq.s32.totalorder %s29, 0
      %p181 = por %p179, %p180
      %p182 = scmp.ne.s32.totalorder %s168, %s169
      %p183 = scmp.eq.s32.totalorder %s30, 1
      %p184 = por %p182, %p183
      %p186 = scmp.ne.s32.totalorder %s169, %s185
      %p187 = scmp.eq.s32.totalorder %s30, 0
      %p188 = por %p186, %p187
      %p189 = scmp.le.s32.totalorder 1, %s24
      %p190 = scmp.lt.s32.totalorder %s24, 3
      %p191 = pnand %p189, %p190
      %p192 = pneg %p191
      // Predicated region
      $region9: #{tpu_custom_call.1} parent=5 // pred_check
        _
      $region10: #{tpu_custom_call.1} parent=5 // pred_check_branch
        %194 = sbr.rel (%p191) target = $region12
      $region11: #{tpu_custom_call.1} parent=5 // pred_region
        %s195 = ssub.s32 %s24, 1
        // Predicated region
        $region13: #{tpu_custom_call.1} parent=11 // pred_check
          %p196 = pneg %p45
        $region14: #{tpu_custom_call.1} parent=11 // pred_check_branch
          %198 = sbr.rel (%p196) target = $region16
        $region15: #{tpu_custom_call.1} parent=11 // pred_region
          _
        $region16: #{tpu_custom_call.1} parent=11 // pred_fallthru
          _
        // Predicated region
        $region17: #{tpu_custom_call.1} parent=11 // pred_check
          %p199 = pneg %p66
        $region18: #{tpu_custom_call.1} parent=11 // pred_check_branch
          %201 = sbr.rel (%p199) target = $region20
        $region19: #{tpu_custom_call.1} parent=11 // pred_region
          _
        $region20: #{tpu_custom_call.1} parent=11 // pred_fallthru
          _
        // Predicated region
        $region21: #{tpu_custom_call.1} parent=11 // pred_check
          %p202 = pneg %p87
        $region22: #{tpu_custom_call.1} parent=11 // pred_check_branch
          %204 = sbr.rel (%p202) target = $region24
        $region23: #{tpu_custom_call.1} parent=11 // pred_region
          %s206 = ssub.s32 16, 16
          %207 = vsyncadd [#allocation6], %s206
          %s209 = sshll.u32 [#allocation5], 4
          %s210 = int_to_ptr.vmem [resolvable:$true] %s209
          %212 = dma.hbm_to_vmem [thread:$0]  %s4, 16, %s210, [#allocation6]
        $region24: #{tpu_custom_call.1} parent=11 // pred_fallthru
          _
        // Predicated region
        $region25: #{tpu_custom_call.1} parent=11 // pred_check
          %p213 = pneg %p108
        $region26: #{tpu_custom_call.1} parent=11 // pred_check_branch
          %215 = sbr.rel (%p213) target = $region28
        $region27: #{tpu_custom_call.1} parent=11 // pred_region
          _
        $region28: #{tpu_custom_call.1} parent=11 // pred_fallthru
          _
        // Predicated region
        $region29: #{tpu_custom_call.1} parent=11 // pred_check
          %p216 = pneg %p155
        $region30: #{tpu_custom_call.1} parent=11 // pred_check_branch
          %218 = sbr.rel (%p216) target = $region32
        $region31: #{tpu_custom_call.1} parent=11 // pred_region
          _
        $region32: #{tpu_custom_call.1} parent=11 // pred_fallthru
          _
      $region12: #{tpu_custom_call.1} parent=5 // pred_fallthru
        _
      %p219 = scmp.lt.s32.totalorder %s24, 2
      // Predicated region
      $region33: #{tpu_custom_call.1} parent=5 // pred_check
        %p220 = pneg %p219
      $region34: #{tpu_custom_call.1} parent=5 // pred_check_branch
        %222 = sbr.rel (%p220) target = $region36
      $region35: #{tpu_custom_call.1} parent=5 // pred_region
        // Predicated region
        $region37: #{tpu_custom_call.1} parent=35 // pred_check
          %p223 = pneg %p128
        $region38: #{tpu_custom_call.1} parent=35 // pred_check_branch
          %225 = sbr.rel (%p223) target = $region40
        $region39: #{tpu_custom_call.1} parent=35 // pred_region
          %p226 = scmp.lt.s32.totalorder %s24, 1
          %s227 = scalar_select %p226, %s24, 1
          %s228 = smul.addr %s227, 8
          %s229 = scalar_lea.vmem %s6, %s228
        $region40: #{tpu_custom_call.1} parent=35 // pred_fallthru
          _
      $region36: #{tpu_custom_call.1} parent=5 // pred_fallthru
        _
      %p230 = scmp.le.s32.totalorder 1, %s24
      %p231 = scmp.lt.s32.totalorder %s24, 3
      %p232 = pnand %p230, %p231
      %p233 = pneg %p232
      // Predicated region
      $region41: #{tpu_custom_call.1} parent=5 // pred_check
        _
      $region42: #{tpu_custom_call.1} parent=5 // pred_check_branch
        %235 = sbr.rel (%p232) target = $region44
      $region43: #{tpu_custom_call.1} parent=5 // pred_region
        %s236 = ssub.s32 %s24, 1
        // Predicated region
        $region45: #{tpu_custom_call.1} parent=43 // pred_check
          %p237 = pneg %p87
        $region46: #{tpu_custom_call.1} parent=43 // pred_check_branch
          %239 = sbr.rel (%p237) target = $region48
        $region47: #{tpu_custom_call.1} parent=43 // pred_region
          %240 = dma.done [#allocation6], 16
        $region48: #{tpu_custom_call.1} parent=43 // pred_fallthru
          _
        %p241 = pneg %p45
        %p242 = pneg %p42
        %p243 = pneg %p66
        %p244 = pneg %p63
        %p245 = pneg %p87
        %p246 = pneg %p84
        %p247 = pneg %p108
        %p248 = pneg %p105
        %p249 = scmp.lt.s32.totalorder %s29, 1
        %s250 = scalar_select %p249, %s29, 1
        %s251 = smul.addr %s250, 8
        %s252 = scalar_lea.vmem %s6, %s251
        %p253 = pneg %p134
        %p254 = pneg %p131
        %p255 = pneg %p155
        %p256 = pneg %p152
        %p257 = pneg %p181
        %p258 = pneg %p178
        %s259 = sand.u32 %s168, 1
        %s260 = scalar_lea.sflag [#allocation7], %s259
        %s261 = sand.u32 %s168, 1
        %s262 = smul.addr %s261, 8
        %s263 = scalar_lea.vmem [#allocation8], %s262
        %p264 = scmp.lt.s32.totalorder %s29, 1
        %s265 = scalar_select %p264, %s29, 1
        %s266 = smul.addr %s265, 8
        %s267 = scalar_lea.vmem %s6, %s266
        %s268 = smul.u32 %s29, 8
        %s269 = sld [smem:[#allocation3 + %s268]]
        %s270 = sld [smem:[#allocation4 + %s268]]
        %s271 = scalar_lea.vmem %s2, %s269
        %v272 = vld [vmem:[%s271] sm:$0x1]
        %s273 = scalar_lea.vmem %s3, %s270
        %v274 = vld [vmem:[%s273] sm:$0x1]
        %v275 = vadd.f32 %v272, %v274
        %276 = vst [vmem:[%s263] sm:$0x1] %v275
        %s277 = sadd.s32 %s268, 1
        %s278 = sld [smem:[#allocation3 + %s277]]
        %s279 = sld [smem:[#allocation4 + %s277]]
        %s280 = scalar_lea.vmem %s2, %s278
        %v281 = vld [vmem:[%s280] sm:$0x1]
        %s282 = scalar_lea.vmem %s3, %s279
        %v283 = vld [vmem:[%s282] sm:$0x1]
        %v284 = vadd.f32 %v281, %v283
        %285 = vst [vmem:[%s263 + $0x1] sm:$0x1] %v284
        %s286 = sadd.s32 %s268, 2
        %s287 = sld [smem:[#allocation3 + %s286]]
        %s288 = sld [smem:[#allocation4 + %s286]]
        %s289 = scalar_lea.vmem %s2, %s287
        %v290 = vld [vmem:[%s289] sm:$0x1]
        %s291 = scalar_lea.vmem %s3, %s288
        %v292 = vld [vmem:[%s291] sm:$0x1]
        %v293 = vadd.f32 %v290, %v292
        %294 = vst [vmem:[%s263 + $0x2] sm:$0x1] %v293
        %s295 = sadd.s32 %s268, 3
        %s296 = sld [smem:[#allocation3 + %s295]]
        %s297 = sld [smem:[#allocation4 + %s295]]
        %s298 = scalar_lea.vmem %s2, %s296
        %v299 = vld [vmem:[%s298] sm:$0x1]
        %s300 = scalar_lea.vmem %s3, %s297
        %v301 = vld [vmem:[%s300] sm:$0x1]
        %v302 = vadd.f32 %v299, %v301
        %303 = vst [vmem:[%s263 + $0x3] sm:$0x1] %v302
        %s304 = sadd.s32 %s268, 4
        %s305 = sld [smem:[#allocation3 + %s304]]
        %s306 = sld [smem:[#allocation4 + %s304]]
        %s307 = scalar_lea.vmem %s2, %s305
        %v308 = vld [vmem:[%s307] sm:$0x1]
        %s309 = scalar_lea.vmem %s3, %s306
        %v310 = vld [vmem:[%s309] sm:$0x1]
        %v311 = vadd.f32 %v308, %v310
        %312 = vst [vmem:[%s263 + $0x4] sm:$0x1] %v311
        %s313 = sadd.s32 %s268, 5
        %s314 = sld [smem:[#allocation3 + %s313]]
        %s315 = sld [smem:[#allocation4 + %s313]]
        %s316 = scalar_lea.vmem %s2, %s314
        %v317 = vld [vmem:[%s316] sm:$0x1]
        %s318 = scalar_lea.vmem %s3, %s315
        %v319 = vld [vmem:[%s318] sm:$0x1]
        %v320 = vadd.f32 %v317, %v319
        %321 = vst [vmem:[%s263 + $0x5] sm:$0x1] %v320
        %s322 = sadd.s32 %s268, 6
        %s323 = sld [smem:[#allocation3 + %s322]]
        %s324 = sld [smem:[#allocation4 + %s322]]
        %s325 = scalar_lea.vmem %s2, %s323
        %v326 = vld [vmem:[%s325] sm:$0x1]
        %s327 = scalar_lea.vmem %s3, %s324
        %v328 = vld [vmem:[%s327] sm:$0x1]
        %v329 = vadd.f32 %v326, %v328
        %330 = vst [vmem:[%s263 + $0x6] sm:$0x1] %v329
        %s331 = sadd.s32 %s268, 7
        %s332 = sld [smem:[#allocation3 + %s331]]
        %s333 = sld [smem:[#allocation4 + %s331]]
        %s334 = scalar_lea.vmem %s2, %s332
        %v335 = vld [vmem:[%s334] sm:$0x1]
        %s336 = scalar_lea.vmem %s3, %s333
        %v337 = vld [vmem:[%s336] sm:$0x1]
        %v338 = vadd.f32 %v335, %v337
        %339 = vst [vmem:[%s263 + $0x7] sm:$0x1] %v338
        %v340 = vld [vmem:[%s263] sm:$0xff]
        %v341 = vld [vmem:[%s267] sm:$0xff]
        %v342 = vld [vmem:[%s7] sm:$0x1]
        %v343 = vld [vmem:[%s7 + $0x1] sm:$0x1]
        %v344 = vld [vmem:[%s7 + $0x2] sm:$0x1]
        %vm345 = vcmp.ge.s32.totalorder %v341, 1
        %v346 = vsel %vm345, 1, 0
        %v347 = vcvt.s32.f32 %v346
        %vm348 = vcmp.ge.s32.totalorder %v341, 2
        %v349 = vsel %vm348, 1, 0
        %v350 = vcvt.s32.f32 %v349
        %v351 = vlaneseq
        %v352 = vshrl.u32 %v351, 7
        %v353 = vsub.s32 0, %v352
        %v354 = vrot.slane %v342, %v353
        %v355 = vadd.f32 %v340, %v354
        %v356 = vsub.f32 %v343, %v342
        %358 = vset.pattern.permute.xlu0 0
        %359 = vperm.xlu0 %358, %v347
        %v360 = vpop.permute.xlu0 %359
        %v362 = vlaneseq
        %v363 = vshrl.u32 %v362, 7
        %v364 = vsub.s32 0, %v363
        %v365 = vrot.slane %v356, %v364
        %v366 = vmul.f32 %v360, %v365
        %v367 = vadd.f32 %v355, %v366
        %v368 = vsub.f32 %v344, %v343
        %370 = vset.pattern.permute.xlu0 0
        %371 = vperm.xlu0 %370, %v350
        %v372 = vpop.permute.xlu0 %371
        %v374 = vlaneseq
        %v375 = vshrl.u32 %v374, 7
        %v376 = vsub.s32 0, %v375
        %v377 = vrot.slane %v368, %v376
        %v378 = vmul.f32 %v372, %v377
        %v379 = vadd.f32 %v367, %v378
        %380 = vadd.xlane.f32.xlu0 %v379
        %v381 = vpop.xlane.xlu0 %380
        %v382 = vmul.f32 %v379, %v379
        %383 = vadd.xlane.f32.xlu0 %v382
        %v384 = vpop.xlane.xlu0 %383
        %v385 = vmul.f32 %v381, 0.0078125
        %v386 = vmul.f32 %v384, 0.0078125
        %v387 = vmul.f32 %v385, %v385
        %v388 = vsub.f32 %v386, %v387
        %v389 = vmax.f32 %v388, 0.0
        %v390 = vadd.f32 %v389, 1e-05
        %v391 = vrsqrt.pop %v390
        %v392 = vsub.f32 %v379, %v385
        %v393 = vmul.f32 %v392, %v391
        %v394 = vld [vmem:[#allocation5] sm:$0x1]
        %v396 = vlaneseq
        %v397 = vshrl.u32 %v396, 7
        %v398 = vsub.s32 0, %v397
        %v399 = vrot.slane %v394, %v398
        %v401 = vmul.f32 %v393, %v399
        %v402 = vld [vmem:[%s5] sm:$0x1]
        %v404 = vlaneseq
        %v405 = vshrl.u32 %v404, 7
        %v406 = vsub.s32 0, %v405
        %v407 = vrot.slane %v402, %v406
        %v409 = vadd.f32 %v401, %v407
        %410 = vst [vmem:[%s263] sm:$0xff] %v409
        %s411 = sand.u32 %s168, 1
        %s412 = scalar_lea.sflag [#allocation7], %s411
        %s413 = sand.u32 %s168, 1
        %s414 = smul.addr %s413, 8
        %s415 = scalar_lea.vmem [#allocation8], %s414
        // Predicated region
        $region49: #{tpu_custom_call.1} parent=43 // pred_check
          %p416 = pneg %p178
        $region50: #{tpu_custom_call.1} parent=43 // pred_check_branch
          %418 = sbr.rel (%p416) target = $region52
        $region51: #{tpu_custom_call.1} parent=43 // pred_region
          %s420 = ssub.s32 128, 128
          %421 = vsyncadd %s412, %s420
          %s422 = smul.addr %s29, 128
          %s423 = scalar_lea.hbm %s8, %s422
          %s425 = sshll.u32 %s415, 4
          %s426 = int_to_ptr.vmem [resolvable:$true] %s425
          %428 = dma.vmem_to_hbm [thread:$0]  %s426, 128, %s423, %s412
        $region52: #{tpu_custom_call.1} parent=43 // pred_fallthru
          _
      $region44: #{tpu_custom_call.1} parent=5 // pred_fallthru
        _
      %p429 = scmp.le.s32.totalorder 2, %s24
      // Predicated region
      $region53: #{tpu_custom_call.1} parent=5 // pred_check
        %p430 = pneg %p429
      $region54: #{tpu_custom_call.1} parent=5 // pred_check_branch
        %432 = sbr.rel (%p430) target = $region56
      $region55: #{tpu_custom_call.1} parent=5 // pred_region
        %s433 = ssub.s32 %s24, 2
        // Predicated region
        $region57: #{tpu_custom_call.1} parent=55 // pred_check
          %p434 = pneg %p184
        $region58: #{tpu_custom_call.1} parent=55 // pred_check_branch
          %436 = sbr.rel (%p434) target = $region60
        $region59: #{tpu_custom_call.1} parent=55 // pred_region
          %s437 = sand.u32 %s169, 1
          %s438 = scalar_lea.sflag [#allocation7], %s437
          %s439 = sand.u32 %s169, 1
          %s440 = smul.addr %s439, 8
          %s441 = scalar_lea.vmem [#allocation8], %s440
          %442 = dma.done %s438, 128
        $region60: #{tpu_custom_call.1} parent=55 // pred_fallthru
          _
      $region56: #{tpu_custom_call.1} parent=5 // pred_fallthru
        _
    $region6: #{tpu_custom_call.1} parent=1 // loop_footer
      %s28 = sadd.s32 1, %s24
    $region7: #{tpu_custom_call.1} parent=1 // loop_footer_branch
      %23 = sbr.rel target = $region3
    $region8: #{tpu_custom_call.1} parent=1 // loop_exit
      _
    %443 = vsyncpa [#allocation6], 1
    %s444 = scalar_lea.sflag [#allocation6], 1
    %445 = vsyncpa %s444, 1
    %446 = vsyncpa [#allocation7], 1
    %s447 = scalar_lea.sflag [#allocation7], 1
    %448 = vsyncpa %s447, 1

</llo_original>
